<compile_context>
chip_gen: v7x
topology: tpu7x:2x2x1
jax: 0.10.0
libtpu: 0.0.40
codegen_flags: <defaults>
</compile_context>

<pallas_src>
import jax
import jax.numpy as jnp
from jax.experimental import pallas as pl
from jax.experimental.pallas import tpu as pltpu


def _unnormalize_kernel(scale_ref, offset_ref, x_ref, o_ref):
    # scale/offset blocks are (tm, 1) or (1, tw); jnp broadcasting handles both.
    o_ref[...] = x_ref[...] * scale_ref[...] + offset_ref[...]


def _choose_tiles(rows, cols, itemsize, target_bytes, sub,
                  lane=128, tm_cap=1024, small_bytes=512 * 1024, min_blocks=4):
    """Pick (tm, tw) obeying the (8,128)/full-dim rule, ~target_bytes per block."""
    total = rows * cols * itemsize
    if total <= small_bytes:
        # Tiny tensor: one block; grid/pipeline overhead isn't worth it.
        return rows, cols

    # Want enough blocks to pipeline DMA/compute and shard across v7x's 2 TCs.
    blocks_wanted = max(min_blocks, -(-total // target_bytes))
    blocks_wanted += blocks_wanted % 2  # even block count

    row_bytes = cols * itemsize

    # Preferred: full-lane-width row strips (dense unmasked stores; small
    # lane-padded scale/offset blocks because tm is capped).
    if rows >= 2 * sub and sub * row_bytes <= target_bytes:
        tm_fit = (target_bytes // row_bytes) // sub * sub          # fits byte target
        tm_split = max(sub, (rows // blocks_wanted) // sub * sub)  # >= blocks_wanted steps
        tm = max(sub, min(tm_fit, tm_split, tm_cap))
        return tm, cols

    # Fallback: few rows (or a sub-row strip already exceeds the byte target):
    # keep a thin row strip and tile the lane axis in multiples of 128.
    tm = rows if rows <= 2 * sub else sub
    if cols <= lane:
        return tm, cols
    tw_fit = max(lane, (target_bytes // (tm * itemsize)) // lane * lane)
    tw_split = max(lane, (cols // blocks_wanted) // lane * lane)
    tw = min(tw_fit, tw_split)
    if tw >= cols:
        return tm, cols
    return tm, tw


def unnormalize(x, mean, std, *, target_block_bytes=4 * 1024 * 1024, donate_x=False):
    """x: (N, C, H, W) or (C, H, W); mean, std: length-C per-channel sequences."""
    squeeze_back = False
    if x.ndim == 3:
        # Torch broadcasting of (C,H,W) * (1,C,1,1) yields (1,C,H,W); match that.
        x = x[None]
        squeeze_back = False  # torch returns 4D here too
    N, C, H, W = x.shape
    dtype = x.dtype
    itemsize = jnp.dtype(dtype).itemsize
    sub = 8 * (4 // itemsize)  # dtype-aware sublane tile: 8 f32, 16 bf16, 32 int8/fp8
    HW = H * W

    mean_arr = jnp.asarray(mean, dtype=dtype).reshape(C)
    std_arr = jnp.asarray(std, dtype=dtype).reshape(C)

    lane_dense = (HW >= 128) and (HW % 128 == 0)
    if lane_dense:
        # (N*C, H*W): per-row (row = n*C + c) scale/offset columns.
        rows, cols = N * C, HW
        x2 = x.reshape(rows, cols)
        scale = jnp.broadcast_to(std_arr, (N, C)).reshape(rows, 1)
        offset = jnp.broadcast_to(mean_arr, (N, C)).reshape(rows, 1)
    else:
        # (N, C*H*W): per-lane scale/offset rows (keeps the lane axis dense).
        rows, cols = N, C * HW
        x2 = x.reshape(rows, cols)
        scale = jnp.broadcast_to(std_arr[:, None], (C, HW)).reshape(1, cols)
        offset = jnp.broadcast_to(mean_arr[:, None], (C, HW)).reshape(1, cols)

    tm, tw = _choose_tiles(rows, cols, itemsize, target_block_bytes, sub)
    grid = (pl.cdiv(rows, tm), pl.cdiv(cols, tw))

    if lane_dense:
        scale_spec = pl.BlockSpec((tm, 1), lambda i, j: (i, 0))
        offset_spec = pl.BlockSpec((tm, 1), lambda i, j: (i, 0))
        # (tm, 1) blocks are lane-padded to 128 in VMEM; 2 arrays x 2 buffers.
        aux_vmem = 2 * 2 * tm * 128 * itemsize
    else:
        scale_spec = pl.BlockSpec((1, tw), lambda i, j: (0, j))
        offset_spec = pl.BlockSpec((1, tw), lambda i, j: (0, j))
        # (1, tw) blocks are sublane-padded to 8; 2 arrays x 2 buffers.
        aux_vmem = 2 * 2 * 8 * tw * itemsize

    block_bytes = tm * tw * itemsize
    # x + out, double-buffered, plus lane/sublane-padded scale/offset blocks.
    est_vmem = 4 * block_bytes + aux_vmem
    vmem_limit = int(min(48 * 1024 * 1024, max(2 * est_vmem, 32 * 1024 * 1024)))

    total_bytes = rows * cols * itemsize
    cost = pl.CostEstimate(
        flops=2 * rows * cols,
        transcendentals=0,
        bytes_accessed=2 * total_bytes + 2 * scale.size * itemsize,
    )

    out2 = pl.pallas_call(
        _unnormalize_kernel,
        out_shape=jax.ShapeDtypeStruct((rows, cols), dtype),
        grid=grid,
        in_specs=[
            scale_spec,
            offset_spec,
            pl.BlockSpec((tm, tw), lambda i, j: (i, j)),
        ],
        out_specs=pl.BlockSpec((tm, tw), lambda i, j: (i, j)),
        compiler_params=pltpu.CompilerParams(
            dimension_semantics=("parallel", "parallel"),
            vmem_limit_bytes=vmem_limit,
        ),
        cost_estimate=cost,
        input_output_aliases=({2: 0} if donate_x else {}),
    )(scale, offset, x2)

    out = out2.reshape(N, C, H, W)
    return out[0] if squeeze_back else out


if __name__ == "__main__":
    key = jax.random.PRNGKey(0)

    # Case 1: lane-aligned spatial plane (H*W = 256, multiple of 128).
    N, C, H, W = 2, 4, 16, 16
    x = jax.random.normal(key, (N, C, H, W), dtype=jnp.float32)
    mean = [0.485, 0.456, 0.406, 0.5][:C]
    std = [0.229, 0.224, 0.225, 0.25][:C]

    out = unnormalize(x, mean, std)
    out = jax.block_until_ready(out)
    ref = x * jnp.asarray(std, jnp.float32).reshape(1, C, 1, 1) + \
        jnp.asarray(mean, jnp.float32).reshape(1, C, 1, 1)
    assert out.shape == (N, C, H, W)
    assert jnp.allclose(out, ref, atol=1e-6), "mismatch vs reference (aligned case)"

    # Case 2: small / misaligned spatial plane (7x7) -> (N, C*H*W) layout path.
    N2, C2, H2, W2 = 2, 3, 7, 7
    x2 = jax.random.normal(jax.random.PRNGKey(1), (N2, C2, H2, W2), dtype=jnp.float32)
    mean2 = [0.485, 0.456, 0.406]
    std2 = [0.229, 0.224, 0.225]

    out2 = unnormalize(x2, mean2, std2)
    out2 = jax.block_until_ready(out2)
    ref2 = x2 * jnp.asarray(std2, jnp.float32).reshape(1, C2, 1, 1) + \
        jnp.asarray(mean2, jnp.float32).reshape(1, C2, 1, 1)
    assert out2.shape == (N2, C2, H2, W2)
    assert jnp.allclose(out2, ref2, atol=1e-6), "mismatch vs reference (misaligned case)"

    print("KERNEL_OK")
</pallas_src>

<mosaic_0001>
module attributes {stable_mosaic.version = 11 : i64} {
  func.func @_unnormalize_kernel(%arg0: i32, %arg1: i32, %arg2: memref<8x1xf32, #tpu.memory_space<vmem>>, %arg3: memref<8x1xf32, #tpu.memory_space<vmem>>, %arg4: memref<8x256xf32, #tpu.memory_space<vmem>>, %arg5: memref<8x256xf32, #tpu.memory_space<vmem>>) attributes {dimension_semantics = [#tpu.dimension_semantics<parallel>, #tpu.dimension_semantics<parallel>], iteration_bounds = array<i64: 1, 1>, scalar_prefetch = 0 : i64, scratch_operands = 0 : i64, tpu.core_type = #tpu.core_type<tc>, window_params = [{transform_indices = @transform_0, window_bounds = array<i64: 8, 1>}, {transform_indices = @transform_1, window_bounds = array<i64: 8, 1>}, {transform_indices = @transform_2, window_bounds = array<i64: 8, 256>}, {transform_indices = @transform_3, window_bounds = array<i64: 8, 256>}]} {
    %c0 = arith.constant 0 : index
    %c0_0 = arith.constant 0 : index
    %0 = vector.load %arg4[%c0, %c0_0] : memref<8x256xf32, #tpu.memory_space<vmem>>, vector<8x256xf32>
    %c0_1 = arith.constant 0 : index
    %c0_2 = arith.constant 0 : index
    %1 = vector.load %arg2[%c0_1, %c0_2] : memref<8x1xf32, #tpu.memory_space<vmem>>, vector<8x1xf32>
    %2 = vector.broadcast %1 : vector<8x1xf32> to vector<8x256xf32>
    %3 = arith.mulf %0, %2 : vector<8x256xf32>
    %c0_3 = arith.constant 0 : index
    %c0_4 = arith.constant 0 : index
    %4 = vector.load %arg3[%c0_3, %c0_4] : memref<8x1xf32, #tpu.memory_space<vmem>>, vector<8x1xf32>
    %5 = vector.broadcast %4 : vector<8x1xf32> to vector<8x256xf32>
    %6 = arith.addf %3, %5 : vector<8x256xf32>
    %c0_5 = arith.constant 0 : index
    %c0_6 = arith.constant 0 : index
    %7 = vector.load %arg5[%c0_5, %c0_6] : memref<8x256xf32, #tpu.memory_space<vmem>>, vector<8x256xf32>
    tpu.vector_store %arg5[%c0_5, %c0_6], %6 {strides = array<i32>} : memref<8x256xf32, #tpu.memory_space<vmem>>, vector<8x256xf32>,
    return
  }
  func.func @transform_0(%arg0: i32, %arg1: i32) -> (i32, i32) {
    %c0_i32 = arith.constant 0 : i32
    %c0_i32_0 = arith.constant 0 : i32
    return %arg0, %c0_i32 : i32, i32
  }
  func.func @transform_1(%arg0: i32, %arg1: i32) -> (i32, i32) {
    %c0_i32 = arith.constant 0 : i32
    %c0_i32_0 = arith.constant 0 : i32
    return %arg0, %c0_i32 : i32, i32
  }
  func.func @transform_2(%arg0: i32, %arg1: i32) -> (i32, i32) {
    %c0_i32 = arith.constant 0 : i32
    return %arg0, %arg1 : i32, i32
  }
  func.func @transform_3(%arg0: i32, %arg1: i32) -> (i32, i32) {
    %c0_i32 = arith.constant 0 : i32
    return %arg0, %arg1 : i32, i32
  }
}

</mosaic_0001>

<llo_original>
// kernel: tpu_custom_call.1
$region0: #{tpu_custom_call.1}
  #allocation0 [shape = 'u32[]', space=smem, size = 0x4, offset = 0x4, fixed_abs, tag = 'smem constant byte address 0x4 - core index']
  #allocation1 [shape = 'u32[144,128]{1,0:T(1,128)}', space=vmem, size = 0x12000, scoped, tag = 'internal scratch']
  %s0 = inlined_call_operand.vmem [shape: f32[8,1], index: 0, kind: input, shape index: {}]
  %s1 = inlined_call_operand.vmem [shape: f32[8,1], index: 1, kind: input, shape index: {}]
  %s2 = inlined_call_operand.vmem [shape: f32[8,256], index: 2, kind: input, shape index: {}]
  %s3 = inlined_call_operand.hbm [shape: f32[8,256], index: 3, kind: output, shape index: {}]
  %s4 = sld [smem:[#allocation0]]
  $region22: #{tpu_custom_call.1} parent=0
    _
  %s6 = ssub.s32 1, %s4
  %s7 = scalar_select 0, %s6, %s4
  $region1: #{tpu_custom_call.1} parent=0
    #allocation2 [shape = 'u8[8192]{0}', space=vmem, size = 0x2000, scoped, tag = 'output window, operand 0, single buffered']
    #allocation3 [shape = 's32[1]{0}', space=sflag, size = 0x4, scoped, tag = 'scoped memory for tpu_custom_call.1']
    %8 = vsyncpa [#allocation3], 0
    // Predicated region
    $region2: #{tpu_custom_call.1} parent=1 // pred_check
      _
    $region3: #{tpu_custom_call.1} parent=1 // pred_check_branch
      %10 = sbr.rel (0) target = $region5
    $region4: #{tpu_custom_call.1} parent=1 // pred_region
      _
    $region5: #{tpu_custom_call.1} parent=1 // pred_fallthru
      _
    // Predicated region
    $region6: #{tpu_custom_call.1} parent=1 // pred_check
      _
    $region7: #{tpu_custom_call.1} parent=1 // pred_check_branch
      %12 = sbr.rel (0) target = $region9
    $region8: #{tpu_custom_call.1} parent=1 // pred_region
      _
    $region9: #{tpu_custom_call.1} parent=1 // pred_fallthru
      _
    // Predicated region
    $region10: #{tpu_custom_call.1} parent=1 // pred_check
      _
    $region11: #{tpu_custom_call.1} parent=1 // pred_check_branch
      %14 = sbr.rel (0) target = $region13
    $region12: #{tpu_custom_call.1} parent=1 // pred_region
      _
    $region13: #{tpu_custom_call.1} parent=1 // pred_fallthru
      _
    %v15 = vld [vmem:[%s2] sm:$0xff]
    %v16 = vld [vmem:[%s2 + $0x8] sm:$0xff]
    %v17 = vld [vmem:[%s0] sm:$0xff]
    %19 = vset.pattern.permute.xlu0 0
    %20 = vperm.xlu0 %19, %v17
    %v21 = vpop.permute.xlu0 %20
    %v23 = vmul.f32 %v15, %v21
    %v24 = vmul.f32 %v16, %v21
    %v25 = vld [vmem:[%s1] sm:$0xff]
    %27 = vset.pattern.permute.xlu0 0
    %28 = vperm.xlu0 %27, %v25
    %v29 = vpop.permute.xlu0 %28
    %v31 = vadd.f32 %v23, %v29
    %v32 = vadd.f32 %v24, %v29
    %33 = vst [vmem:[#allocation2] sm:$0xff] %v31
    %34 = vst [vmem:[#allocation2 + $0x8] sm:$0xff] %v32
    // Predicated region
    $region14: #{tpu_custom_call.1} parent=1 // pred_check
      _
    $region15: #{tpu_custom_call.1} parent=1 // pred_check_branch
      %36 = sbr.rel (0) target = $region17
    $region16: #{tpu_custom_call.1} parent=1 // pred_region
      %s38 = ssub.s32 256, 256
      %39 = vsyncadd [#allocation3], %s38
      %s41 = sshll.u32 [#allocation2], 4
      %s42 = int_to_ptr.vmem [resolvable:$true] %s41
      %44 = dma.vmem_to_hbm [thread:$0]  %s42, 256, %s3, [#allocation3]
    $region17: #{tpu_custom_call.1} parent=1 // pred_fallthru
      _
    // Predicated region
    $region18: #{tpu_custom_call.1} parent=1 // pred_check
      _
    $region19: #{tpu_custom_call.1} parent=1 // pred_check_branch
      %46 = sbr.rel (0) target = $region21
    $region20: #{tpu_custom_call.1} parent=1 // pred_region
      %47 = dma.done [#allocation3], 256
    $region21: #{tpu_custom_call.1} parent=1 // pred_fallthru
      _
    %48 = vsyncpa [#allocation3], 1

</llo_original>
